<compile_context>
chip_gen: v7x
topology: tpu7x:2x2x1
jax: 0.10.0
libtpu: 0.0.40
codegen_flags: <defaults>
</compile_context>

<pallas_src>
import functools

import jax
import jax.numpy as jnp
from jax import lax
from jax.experimental import pallas as pl
from jax.experimental.pallas import tpu as pltpu


def _weighted_xor_kernel(out_ref, tgt_ref, sd_ref, sa_ref, *,
                         n_rows, tile_rows, ragged):
    """Per-tile partial sums of d and |d| over a (tile_rows, D) block."""
    d = out_ref[...].astype(jnp.float32) - tgt_ref[...].astype(jnp.float32)

    def _emit(dd):
        # Sublane (axis-0) reduce only: mostly vreg adds on the VPU, result is a
        # lane-dense (1, D) row written to this step's own output block.
        sd_ref[0] = jnp.sum(dd, axis=0, keepdims=True)
        sa_ref[0] = jnp.sum(jnp.abs(dd), axis=0, keepdims=True)

    if not ragged:
        _emit(d)
    else:
        i = pl.program_id(0)
        last = pl.num_programs(0) - 1

        @pl.when(i != last)
        def _full_tile():
            _emit(d)

        @pl.when(i == last)
        def _ragged_tail():
            # Only the last tile pays for the mask; rows past the batch hold
            # unspecified data and must not reach the partial sums.
            row_ids = i * tile_rows + lax.broadcasted_iota(
                jnp.int32, (tile_rows, 1), 0)
            _emit(jnp.where(row_ids < n_rows, d, 0.0))


def _streaming_budget_bytes():
    """Total bytes for the streamed, double-buffered input blocks (2 in x 2 buf)."""
    kind = ""
    try:
        kind = jax.devices()[0].device_kind.lower()
    except Exception:
        pass
    if "v5 lite" in kind or "v5e" in kind or "v5litepod" in kind:
        return 12 << 20     # fits v5e's 16 MiB scoped-VMEM default with headroom
    if "v6" in kind:
        return 26 << 20     # v6e: 32 MiB scoped default, 128 MiB physical
    # v7x and unknown: only 64 MiB physical VMEM per TensorCore -> stay modest.
    return 16 << 20


def _auto_tile_rows(n, dim, out_dtype, tgt_dtype):
    """Largest aligned row tile so 2 inputs x 2 pipeline buffers fit the budget."""
    out_it = jnp.dtype(out_dtype).itemsize
    tgt_it = jnp.dtype(tgt_dtype).itemsize
    # Sublane alignment from the most tightly packed streamed dtype:
    # 8 rows (f32), 16 (bf16/f16), 32 (int8/bool).
    align = max(8, 8 * (4 // max(1, min(out_it, tgt_it))))
    per_row = 2 * dim * (out_it + tgt_it)          # x2 for double buffering
    tn = max(align, _streaming_budget_bytes() // per_row)
    tn = (tn // align) * align                      # no hard row cap: size by bytes
    n_pad = ((n + align - 1) // align) * align
    return int(min(tn, n_pad))


def weighted_xor_loss(output, target, w, *, weight, weight_decay, tile_rows=None):
    """Scalar weightedXor loss; data term streamed through a Pallas kernel."""
    n, dim = output.shape
    assert target.shape == (n, dim)
    assert w.shape[1] == dim

    if tile_rows is None:
        tile_rows = _auto_tile_rows(n, dim, output.dtype, target.dtype)
    tile_rows = int(tile_rows)

    grid_n = pl.cdiv(n, tile_rows)
    ragged = (n % tile_rows) != 0

    kernel = functools.partial(
        _weighted_xor_kernel, n_rows=n, tile_rows=tile_rows, ragged=ragged)

    # Explicit VMEM limit: 2 inputs x 2 pipeline buffers + headroom for the tiny
    # partial-sum outputs / internal scratch.  Kept <= 48 MiB so it also fits
    # v7x's 64 MiB physical VMEM per TensorCore.
    block_bytes = tile_rows * dim * (
        jnp.dtype(output.dtype).itemsize + jnp.dtype(target.dtype).itemsize)
    vmem_limit = int(min(48 << 20, max(24 << 20, 2 * block_bytes + (8 << 20))))

    part_d, part_abs = pl.pallas_call(
        kernel,
        grid=(grid_n,),
        in_specs=[
            pl.BlockSpec((tile_rows, dim), lambda i: (i, 0)),   # output: streamed
            pl.BlockSpec((tile_rows, dim), lambda i: (i, 0)),   # target: streamed
        ],
        out_specs=[
            pl.BlockSpec((1, 1, dim), lambda i: (i, 0, 0)),     # per-tile sum(d)
            pl.BlockSpec((1, 1, dim), lambda i: (i, 0, 0)),     # per-tile sum(|d|)
        ],
        out_shape=[
            jax.ShapeDtypeStruct((grid_n, 1, dim), jnp.float32),
            jax.ShapeDtypeStruct((grid_n, 1, dim), jnp.float32),
        ],
        compiler_params=pltpu.CompilerParams(
            # Independent per-tile partials -> "parallel": both v7x TensorCores
            # can split the batch axis; harmless on single-TC v5e/v6e.
            dimension_semantics=("parallel",),
            vmem_limit_bytes=vmem_limit,
        ),
    )(output, target)

    # Tiny final combine in XLA (O(grid*D) + O(K*D)): mean scaling, weighted mix
    # of the reformulated data term, and the weight-decay regularizer over w.
    sum_d = jnp.sum(part_d, dtype=jnp.float32)
    sum_abs = jnp.sum(part_abs, dtype=jnp.float32)
    wgt = jnp.float32(weight)
    data_term = (0.5 * sum_abs + (wgt - 0.5) * sum_d) / jnp.float32(n)

    w32 = w.astype(jnp.float32)
    reg = jnp.sum(jnp.maximum(jnp.sum(w32 - 1.0 / dim, axis=1), 1.0) ** 2)
    return data_term + jnp.float32(weight_decay) * reg


def _reference(output, target, w, *, weight, weight_decay):
    output = output.astype(jnp.float32)
    target = target.astype(jnp.float32)
    w = w.astype(jnp.float32)
    d = target.shape[1]
    diff = (jnp.maximum(output - target, 0.0).sum(1) * weight).mean() + \
           (jnp.maximum(target - output, 0.0).sum(1) * (1.0 - weight)).mean()
    diff += weight_decay * jnp.sum(
        jnp.maximum((w - 1.0 / d).sum(1), 1.0) ** 2)
    return diff


if __name__ == "__main__":
    weight = 0.1          # "weight" = data sparsity (from weightedXor.__init__)
    weight_decay = 0.01

    # Case 1: f32, multi-step grid (tile_rows=64 -> grid of 4), N divisible by tile.
    N, D, K = 256, 256, 16
    k1, k2, k3 = jax.random.split(jax.random.PRNGKey(0), 3)
    output = jax.random.uniform(k1, (N, D), dtype=jnp.float32)              # net output
    target = (jax.random.uniform(k2, (N, D)) < weight).astype(jnp.float32)  # binary target
    w = jax.random.uniform(k3, (K, D), dtype=jnp.float32) * 0.2             # encoder weights

    loss = jax.block_until_ready(
        weighted_xor_loss(output, target, w, weight=weight,
                          weight_decay=weight_decay, tile_rows=64))
    ref = _reference(output, target, w, weight=weight, weight_decay=weight_decay)
    assert jnp.allclose(loss, ref, rtol=1e-4, atol=1e-4), (loss, ref)

    # Case 2: ragged batch (N=200, tile 64 -> grid of 4, mask only on last tile).
    N2, D2, K2 = 200, 128, 8
    k4, k5, k6 = jax.random.split(jax.random.PRNGKey(1), 3)
    output2 = jax.random.uniform(k4, (N2, D2), dtype=jnp.float32)
    target2 = (jax.random.uniform(k5, (N2, D2)) < weight).astype(jnp.float32)
    w2 = jax.random.uniform(k6, (K2, D2), dtype=jnp.float32) * 0.2

    loss2 = jax.block_until_ready(
        weighted_xor_loss(output2, target2, w2, weight=weight,
                          weight_decay=weight_decay, tile_rows=64))
    ref2 = _reference(output2, target2, w2, weight=weight, weight_decay=weight_decay)
    assert jnp.allclose(loss2, ref2, rtol=1e-4, atol=1e-4), (loss2, ref2)

    # Case 3: auto byte-budgeted tiling + low-precision streaming (bf16 output,
    # int8 binary target) -- halves/quarters HBM traffic for this BW-bound kernel.
    output3 = output.astype(jnp.bfloat16)
    target3 = target.astype(jnp.int8)
    loss3 = jax.block_until_ready(
        weighted_xor_loss(output3, target3, w, weight=weight,
                          weight_decay=weight_decay))
    ref3 = _reference(output3, target3, w, weight=weight, weight_decay=weight_decay)
    assert jnp.allclose(loss3, ref3, rtol=2e-3, atol=2e-3), (loss3, ref3)

    print("KERNEL_OK")
</pallas_src>

<mosaic_0001>
module attributes {stable_mosaic.version = 11 : i64} {
  func.func @_weighted_xor_kernel(%arg0: i32, %arg1: memref<64x256xf32, #tpu.memory_space<vmem>>, %arg2: memref<64x256xf32, #tpu.memory_space<vmem>>, %arg3: memref<1x1x256xf32, #tpu.memory_space<vmem>>, %arg4: memref<1x1x256xf32, #tpu.memory_space<vmem>>) attributes {dimension_semantics = [#tpu.dimension_semantics<parallel>], iteration_bounds = array<i64: 4>, scalar_prefetch = 0 : i64, scratch_operands = 0 : i64, tpu.core_type = #tpu.core_type<tc>, window_params = [{transform_indices = @transform_0, window_bounds = array<i64: 64, 256>}, {transform_indices = @transform_1, window_bounds = array<i64: 64, 256>}, {transform_indices = @transform_2, window_bounds = array<i64: 1, 1, 256>}, {transform_indices = @transform_3, window_bounds = array<i64: 1, 1, 256>}]} {
    %c0 = arith.constant 0 : index
    %c0_0 = arith.constant 0 : index
    %0 = vector.load %arg1[%c0, %c0_0] : memref<64x256xf32, #tpu.memory_space<vmem>>, vector<64x256xf32>
    %c0_1 = arith.constant 0 : index
    %c0_2 = arith.constant 0 : index
    %1 = vector.load %arg2[%c0_1, %c0_2] : memref<64x256xf32, #tpu.memory_space<vmem>>, vector<64x256xf32>
    %2 = arith.subf %0, %1 : vector<64x256xf32>
    %cst = arith.constant dense<0.000000e+00> : vector<256xf32>
    %3 = vector.multi_reduction <add>, %2, %cst [0] : vector<64x256xf32> to vector<256xf32>
    %4 = vector.shape_cast %3 : vector<256xf32> to vector<1x256xf32>
    %c0_3 = arith.constant 0 : index
    %c0_4 = arith.constant 0 : index
    %c0_5 = arith.constant 0 : index
    %5 = vector.load %arg3[%c0_3, %c0_4, %c0_5] : memref<1x1x256xf32, #tpu.memory_space<vmem>>, vector<1x1x256xf32>
    %6 = vector.shape_cast %5 : vector<1x1x256xf32> to vector<1x256xf32>
    %7 = vector.shape_cast %4 : vector<1x256xf32> to vector<1x1x256xf32>
    tpu.vector_store %arg3[%c0_3, %c0_4, %c0_5], %7 {strides = array<i32>} : memref<1x1x256xf32, #tpu.memory_space<vmem>>, vector<1x1x256xf32>,
    %8 = math.absf %2 : vector<64x256xf32>
    %cst_6 = arith.constant dense<0.000000e+00> : vector<256xf32>
    %9 = vector.multi_reduction <add>, %8, %cst_6 [0] : vector<64x256xf32> to vector<256xf32>
    %10 = vector.shape_cast %9 : vector<256xf32> to vector<1x256xf32>
    %c0_7 = arith.constant 0 : index
    %c0_8 = arith.constant 0 : index
    %c0_9 = arith.constant 0 : index
    %11 = vector.load %arg4[%c0_7, %c0_8, %c0_9] : memref<1x1x256xf32, #tpu.memory_space<vmem>>, vector<1x1x256xf32>
    %12 = vector.shape_cast %11 : vector<1x1x256xf32> to vector<1x256xf32>
    %13 = vector.shape_cast %10 : vector<1x256xf32> to vector<1x1x256xf32>
    tpu.vector_store %arg4[%c0_7, %c0_8, %c0_9], %13 {strides = array<i32>} : memref<1x1x256xf32, #tpu.memory_space<vmem>>, vector<1x1x256xf32>,
    return
  }
  func.func @transform_0(%arg0: i32) -> (i32, i32) {
    %c0_i32 = arith.constant 0 : i32
    %c0_i32_0 = arith.constant 0 : i32
    return %arg0, %c0_i32 : i32, i32
  }
  func.func @transform_1(%arg0: i32) -> (i32, i32) {
    %c0_i32 = arith.constant 0 : i32
    %c0_i32_0 = arith.constant 0 : i32
    return %arg0, %c0_i32 : i32, i32
  }
  func.func @transform_2(%arg0: i32) -> (i32, i32, i32) {
    %c0_i32 = arith.constant 0 : i32
    %c0_i32_0 = arith.constant 0 : i32
    %c0_i32_1 = arith.constant 0 : i32
    return %arg0, %c0_i32, %c0_i32_0 : i32, i32, i32
  }
  func.func @transform_3(%arg0: i32) -> (i32, i32, i32) {
    %c0_i32 = arith.constant 0 : i32
    %c0_i32_0 = arith.constant 0 : i32
    %c0_i32_1 = arith.constant 0 : i32
    return %arg0, %c0_i32, %c0_i32_0 : i32, i32, i32
  }
}

</mosaic_0001>

<llo_original>
// kernel: tpu_custom_call.1
$region0: #{tpu_custom_call.1}
  #allocation0 [shape = 'u32[]', space=smem, size = 0x4, offset = 0x4, fixed_abs, tag = 'smem constant byte address 0x4 - core index']
  #allocation1 [shape = 'u32[144,128]{1,0:T(1,128)}', space=vmem, size = 0x12000, scoped, tag = 'internal scratch']
  %s0 = inlined_call_operand.hbm [shape: f32[256,256], index: 0, kind: input, shape index: {}]
  %s1 = inlined_call_operand.hbm [shape: f32[256,256], index: 1, kind: input, shape index: {}]
  %s2 = inlined_call_operand.hbm [shape: f32[4,1,256], index: 2, kind: output, shape index: {0}]
  %s3 = inlined_call_operand.hbm [shape: f32[4,1,256], index: 3, kind: output, shape index: {1}]
  %4 = xla_tuple %s2, %s3
  %s5 = sld [smem:[#allocation0]]
  $region57: #{tpu_custom_call.1} parent=0
    _
  %s7 = ssub.s32 1, %s5
  %s8 = scalar_select 0, %s7, %s5
  $region1: #{tpu_custom_call.1} parent=0
    #allocation2 [shape = 'u8[131072]{0}', space=vmem, size = 0x20000, scoped, tag = 'input window, operand 0']
    #allocation3 [shape = 's32[2]{0}', space=sflag, size = 0x8, scoped, tag = 'scoped memory for tpu_custom_call.1']
    #allocation4 [shape = 's32[2]{0}', space=sflag, size = 0x8, scoped, tag = 'scoped memory for tpu_custom_call.1']
    #allocation5 [shape = 'u8[131072]{0}', space=vmem, size = 0x20000, scoped, tag = 'input window, operand 1']
    #allocation6 [shape = 's32[2]{0}', space=sflag, size = 0x8, scoped, tag = 'scoped memory for tpu_custom_call.1']
    #allocation7 [shape = 'u8[2048]{0}', space=vmem, size = 0x800, scoped, tag = 'output window, operand 0']
    #allocation8 [shape = 'u8[2048]{0}', space=vmem, size = 0x800, scoped, tag = 'output window, operand 1']
    #allocation9 [shape = 's32[2]{0}', space=sflag, size = 0x8, scoped, tag = 'scoped memory for tpu_custom_call.1']
    %9 = vsyncpa [#allocation3], 0
    %s10 = scalar_lea.sflag [#allocation3], 1
    %11 = vsyncpa %s10, 0
    %12 = vsyncpa [#allocation6], 0
    %s13 = scalar_lea.sflag [#allocation6], 1
    %14 = vsyncpa %s13, 0
    %15 = vsyncpa [#allocation4], 0
    %s16 = scalar_lea.sflag [#allocation4], 1
    %17 = vsyncpa %s16, 0
    %18 = vsyncpa [#allocation9], 0
    %s19 = scalar_lea.sflag [#allocation9], 1
    %20 = vsyncpa %s19, 0
    loop: start=0, step=1, limit=6
    $region2: #{tpu_custom_call.1} parent=1 // loop_pre_header
      _
    $region3: #{tpu_custom_call.1} parent=1 // loop_header
      %s22 = sphi 0, %s26
      %p23 = scmp.ge.s32.totalorder %s22, 6
      %s32 = sphi 0, %s34
      %s35 = sphi 0, %s32
      %s36 = sphi 0, %s35
      %s52 = sphi 0, %s36
      %s58 = sphi 0, %s60
      %s61 = sphi 0, %s58
      %s62 = sphi 0, %s61
      %s78 = sphi 0, %s62
      %s84 = sphi 0, %s86
      %s87 = sphi 0, %s84
      %s88 = sphi 0, %s87
      %s104 = sphi 0, %s88
      %s110 = sphi 0, %s112
      %s113 = sphi 0, %s110
      %s114 = sphi 0, %s113
      %s130 = sphi 0, %s114
    $region4: #{tpu_custom_call.1} parent=1 // loop_header_branch
      %25 = sbr.rel (%p23) target = $region8
    $region5: #{tpu_custom_call.1} parent=1 // loop_body
      %s27 = ssub.s32 %s22, 1
      %s28 = ssub.s32 %s22, 2
      %s29 = sadd.s32 %s22, 1
      %s30 = ssub.s32 %s22, %s29
      %p31 = scmp.eq.s32.totalorder %s30, 0
      %s33 = sadd.s32 %s32, 1
      %s34 = scalar_select %p31, %s32, %s33
      %p37 = pneg %p31
      %p38 = scmp.eq.s32.totalorder %s22, 3
      %p39 = por %p37, %p38
      %p40 = scmp.ne.s32.totalorder %s32, %s35
      %p41 = scmp.eq.s32.totalorder %s22, 0
      %p42 = por %p40, %p41
      %p43 = scmp.ne.s32.totalorder %s32, %s35
      %p44 = scmp.eq.s32.totalorder %s27, 3
      %p45 = por %p43, %p44
      %p46 = scmp.ne.s32.totalorder %s35, %s36
      %p47 = scmp.eq.s32.totalorder %s27, 0
      %p48 = por %p46, %p47
      %p49 = scmp.ne.s32.totalorder %s35, %s36
      %p50 = scmp.eq.s32.totalorder %s28, 3
      %p51 = por %p49, %p50
      %p53 = scmp.ne.s32.totalorder %s36, %s52
      %p54 = scmp.eq.s32.totalorder %s28, 0
      %p55 = por %p53, %p54
      %s56 = ssub.s32 %s22, %s29
      %p57 = scmp.eq.s32.totalorder %s56, 0
      %s59 = sadd.s32 %s58, 1
      %s60 = scalar_select %p57, %s58, %s59
      %p63 = pneg %p57
      %p64 = scmp.eq.s32.totalorder %s22, 3
      %p65 = por %p63, %p64
      %p66 = scmp.ne.s32.totalorder %s58, %s61
      %p67 = scmp.eq.s32.totalorder %s22, 0
      %p68 = por %p66, %p67
      %p69 = scmp.ne.s32.totalorder %s58, %s61
      %p70 = scmp.eq.s32.totalorder %s27, 3
      %p71 = por %p69, %p70
      %p72 = scmp.ne.s32.totalorder %s61, %s62
      %p73 = scmp.eq.s32.totalorder %s27, 0
      %p74 = por %p72, %p73
      %p75 = scmp.ne.s32.totalorder %s61, %s62
      %p76 = scmp.eq.s32.totalorder %s28, 3
      %p77 = por %p75, %p76
      %p79 = scmp.ne.s32.totalorder %s62, %s78
      %p80 = scmp.eq.s32.totalorder %s28, 0
      %p81 = por %p79, %p80
      %s82 = ssub.s32 %s22, %s29
      %p83 = scmp.eq.s32.totalorder %s82, 0
      %s85 = sadd.s32 %s84, 1
      %s86 = scalar_select %p83, %s84, %s85
      %p89 = pneg %p83
      %p90 = scmp.eq.s32.totalorder %s22, 3
      %p91 = por %p89, %p90
      %p92 = scmp.ne.s32.totalorder %s84, %s87
      %p93 = scmp.eq.s32.totalorder %s22, 0
      %p94 = por %p92, %p93
      %p95 = scmp.ne.s32.totalorder %s84, %s87
      %p96 = scmp.eq.s32.totalorder %s27, 3
      %p97 = por %p95, %p96
      %p98 = scmp.ne.s32.totalorder %s87, %s88
      %p99 = scmp.eq.s32.totalorder %s27, 0
      %p100 = por %p98, %p99
      %p101 = scmp.ne.s32.totalorder %s87, %s88
      %p102 = scmp.eq.s32.totalorder %s28, 3
      %p103 = por %p101, %p102
      %p105 = scmp.ne.s32.totalorder %s88, %s104
      %p106 = scmp.eq.s32.totalorder %s28, 0
      %p107 = por %p105, %p106
      %s108 = ssub.s32 %s22, %s29
      %p109 = scmp.eq.s32.totalorder %s108, 0
      %s111 = sadd.s32 %s110, 1
      %s112 = scalar_select %p109, %s110, %s111
      %p115 = pneg %p109
      %p116 = scmp.eq.s32.totalorder %s22, 3
      %p117 = por %p115, %p116
      %p118 = scmp.ne.s32.totalorder %s110, %s113
      %p119 = scmp.eq.s32.totalorder %s22, 0
      %p120 = por %p118, %p119
      %p121 = scmp.ne.s32.totalorder %s110, %s113
      %p122 = scmp.eq.s32.totalorder %s27, 3
      %p123 = por %p121, %p122
      %p124 = scmp.ne.s32.totalorder %s113, %s114
      %p125 = scmp.eq.s32.totalorder %s27, 0
      %p126 = por %p124, %p125
      %p127 = scmp.ne.s32.totalorder %s113, %s114
      %p128 = scmp.eq.s32.totalorder %s28, 3
      %p129 = por %p127, %p128
      %p131 = scmp.ne.s32.totalorder %s114, %s130
      %p132 = scmp.eq.s32.totalorder %s28, 0
      %p133 = por %p131, %p132
      %p134 = scmp.le.s32.totalorder 1, %s22
      %p135 = scmp.lt.s32.totalorder %s22, 5
      %p136 = pnand %p134, %p135
      %p137 = pneg %p136
      // Predicated region
      $region9: #{tpu_custom_call.1} parent=5 // pred_check
        _
      $region10: #{tpu_custom_call.1} parent=5 // pred_check_branch
        %139 = sbr.rel (%p136) target = $region12
      $region11: #{tpu_custom_call.1} parent=5 // pred_region
        %s140 = ssub.s32 %s22, 1
      $region12: #{tpu_custom_call.1} parent=5 // pred_fallthru
        _
      %p141 = scmp.lt.s32.totalorder %s22, 4
      // Predicated region
      $region13: #{tpu_custom_call.1} parent=5 // pred_check
        %p142 = pneg %p141
      $region14: #{tpu_custom_call.1} parent=5 // pred_check_branch
        %144 = sbr.rel (%p142) target = $region16
      $region15: #{tpu_custom_call.1} parent=5 // pred_region
        // Predicated region
        $region17: #{tpu_custom_call.1} parent=15 // pred_check
          %p145 = pneg %p42
        $region18: #{tpu_custom_call.1} parent=15 // pred_check_branch
          %147 = sbr.rel (%p145) target = $region20
        $region19: #{tpu_custom_call.1} parent=15 // pred_region
          %s148 = sand.u32 %s32, 1
          %s149 = scalar_lea.sflag [#allocation3], %s148
          %s150 = sand.u32 %s32, 1
          %s151 = smul.addr %s150, 128
          %s152 = scalar_lea.vmem [#allocation2], %s151
          %s153 = smul.u32 8, %s22
          %s155 = ssub.s32 2048, 2048
          %156 = vsyncadd %s149, %s155
          %s157 = smul.addr %s153, 2
          %s158 = smul.addr %s157, 128
          %s159 = scalar_lea.hbm %s0, %s158
          %s160 = sshll.u32 %s152, 4
          %s161 = int_to_ptr.vmem [resolvable:$true] %s160
          %166 = dma.hbm_to_vmem [thread:$0]  %s159, 2048, %s161, %s149, 256, 256, 16
        $region20: #{tpu_custom_call.1} parent=15 // pred_fallthru
          _
        // Predicated region
        $region21: #{tpu_custom_call.1} parent=15 // pred_check
          %p167 = pneg %p68
        $region22: #{tpu_custom_call.1} parent=15 // pred_check_branch
          %169 = sbr.rel (%p167) target = $region24
        $region23: #{tpu_custom_call.1} parent=15 // pred_region
          %s170 = sand.u32 %s58, 1
          %s171 = scalar_lea.sflag [#allocation6], %s170
          %s172 = sand.u32 %s58, 1
          %s173 = smul.addr %s172, 128
          %s174 = scalar_lea.vmem [#allocation5], %s173
          %s175 = smul.u32 8, %s22
          %s177 = ssub.s32 2048, 2048
          %178 = vsyncadd %s171, %s177
          %s179 = smul.addr %s175, 2
          %s180 = smul.addr %s179, 128
          %s181 = scalar_lea.hbm %s1, %s180
          %s182 = sshll.u32 %s174, 4
          %s183 = int_to_ptr.vmem [resolvable:$true] %s182
          %188 = dma.hbm_to_vmem [thread:$0]  %s181, 2048, %s183, %s171, 256, 256, 16
        $region24: #{tpu_custom_call.1} parent=15 // pred_fallthru
          _
      $region16: #{tpu_custom_call.1} parent=5 // pred_fallthru
        _
      %p189 = scmp.le.s32.totalorder 1, %s22
      %p190 = scmp.lt.s32.totalorder %s22, 5
      %p191 = pnand %p189, %p190
      %p192 = pneg %p191
      // Predicated region
      $region25: #{tpu_custom_call.1} parent=5 // pred_check
        _
      $region26: #{tpu_custom_call.1} parent=5 // pred_check_branch
        %194 = sbr.rel (%p191) target = $region28
      $region27: #{tpu_custom_call.1} parent=5 // pred_region
        %s195 = ssub.s32 %s22, 1
        %s196 = sand.u32 %s35, 1
        %s197 = scalar_lea.sflag [#allocation3], %s196
        %s198 = sand.u32 %s35, 1
        %s199 = smul.addr %s198, 128
        %s200 = scalar_lea.vmem [#allocation2], %s199
        // Predicated region
        $region29: #{tpu_custom_call.1} parent=27 // pred_check
          %p201 = pneg %p48
        $region30: #{tpu_custom_call.1} parent=27 // pred_check_branch
          %203 = sbr.rel (%p201) target = $region32
        $region31: #{tpu_custom_call.1} parent=27 // pred_region
          %204 = dma.done %s197, 2048
        $region32: #{tpu_custom_call.1} parent=27 // pred_fallthru
          _
        %s205 = sand.u32 %s61, 1
        %s206 = scalar_lea.sflag [#allocation6], %s205
        %s207 = sand.u32 %s61, 1
        %s208 = smul.addr %s207, 128
        %s209 = scalar_lea.vmem [#allocation5], %s208
        // Predicated region
        $region33: #{tpu_custom_call.1} parent=27 // pred_check
          %p210 = pneg %p74
        $region34: #{tpu_custom_call.1} parent=27 // pred_check_branch
          %212 = sbr.rel (%p210) target = $region36
        $region35: #{tpu_custom_call.1} parent=27 // pred_region
          %213 = dma.done %s206, 2048
        $region36: #{tpu_custom_call.1} parent=27 // pred_fallthru
          _
        %s214 = sand.u32 %s35, 1
        %s215 = scalar_lea.sflag [#allocation3], %s214
        %s216 = sand.u32 %s35, 1
        %s217 = smul.addr %s216, 128
        %s218 = scalar_lea.vmem [#allocation2], %s217
        %p219 = pneg %p48
        %p220 = pneg %p45
        %s221 = sand.u32 %s61, 1
        %s222 = scalar_lea.sflag [#allocation6], %s221
        %s223 = sand.u32 %s61, 1
        %s224 = smul.addr %s223, 128
        %s225 = scalar_lea.vmem [#allocation5], %s224
        %p226 = pneg %p74
        %p227 = pneg %p71
        %p228 = pneg %p100
        %p229 = pneg %p97
        %s230 = sand.u32 %s87, 1
        %s231 = scalar_lea.sflag [#allocation4], %s230
        %s232 = sand.u32 %s87, 1
        %s233 = smul.addr %s232, 2
        %s234 = scalar_lea.vmem [#allocation7], %s233
        %p235 = pneg %p126
        %p236 = pneg %p123
        %s237 = sand.u32 %s113, 1
        %s238 = scalar_lea.sflag [#allocation9], %s237
        %s239 = sand.u32 %s113, 1
        %s240 = smul.addr %s239, 2
        %s241 = scalar_lea.vmem [#allocation8], %s240
        %s242 = smul.u32 8, %s27
        %s243 = smul.u32 8, %s27
        %v244 = vld [vmem:[%s200] sm:$0xff]
        %v245 = vld [vmem:[%s200 + $0x8] sm:$0xff]
        %v246 = vld [vmem:[%s200 + $0x10] sm:$0xff]
        %v247 = vld [vmem:[%s200 + $0x18] sm:$0xff]
        %v248 = vld [vmem:[%s200 + $0x20] sm:$0xff]
        %v249 = vld [vmem:[%s200 + $0x28] sm:$0xff]
        %v250 = vld [vmem:[%s200 + $0x30] sm:$0xff]
        %v251 = vld [vmem:[%s200 + $0x38] sm:$0xff]
        %v252 = vld [vmem:[%s200 + $0x40] sm:$0xff]
        %v253 = vld [vmem:[%s200 + $0x48] sm:$0xff]
        %v254 = vld [vmem:[%s200 + $0x50] sm:$0xff]
        %v255 = vld [vmem:[%s200 + $0x58] sm:$0xff]
        %v256 = vld [vmem:[%s200 + $0x60] sm:$0xff]
        %v257 = vld [vmem:[%s200 + $0x68] sm:$0xff]
        %v258 = vld [vmem:[%s200 + $0x70] sm:$0xff]
        %v259 = vld [vmem:[%s200 + $0x78] sm:$0xff]
        %v260 = vld [vmem:[%s209] sm:$0xff]
        %v261 = vld [vmem:[%s209 + $0x8] sm:$0xff]
        %v262 = vld [vmem:[%s209 + $0x10] sm:$0xff]
        %v263 = vld [vmem:[%s209 + $0x18] sm:$0xff]
        %v264 = vld [vmem:[%s209 + $0x20] sm:$0xff]
        %v265 = vld [vmem:[%s209 + $0x28] sm:$0xff]
        %v266 = vld [vmem:[%s209 + $0x30] sm:$0xff]
        %v267 = vld [vmem:[%s209 + $0x38] sm:$0xff]
        %v268 = vld [vmem:[%s209 + $0x40] sm:$0xff]
        %v269 = vld [vmem:[%s209 + $0x48] sm:$0xff]
        %v270 = vld [vmem:[%s209 + $0x50] sm:$0xff]
        %v271 = vld [vmem:[%s209 + $0x58] sm:$0xff]
        %v272 = vld [vmem:[%s209 + $0x60] sm:$0xff]
        %v273 = vld [vmem:[%s209 + $0x68] sm:$0xff]
        %v274 = vld [vmem:[%s209 + $0x70] sm:$0xff]
        %v275 = vld [vmem:[%s209 + $0x78] sm:$0xff]
        %v276 = vsub.f32 %v244, %v260
        %v277 = vsub.f32 %v245, %v261
        %v278 = vsub.f32 %v246, %v262
        %v279 = vsub.f32 %v247, %v263
        %v280 = vsub.f32 %v248, %v264
        %v281 = vsub.f32 %v249, %v265
        %v282 = vsub.f32 %v250, %v266
        %v283 = vsub.f32 %v251, %v267
        %v284 = vsub.f32 %v252, %v268
        %v285 = vsub.f32 %v253, %v269
        %v286 = vsub.f32 %v254, %v270
        %v287 = vsub.f32 %v255, %v271
        %v288 = vsub.f32 %v256, %v272
        %v289 = vsub.f32 %v257, %v273
        %v290 = vsub.f32 %v258, %v274
        %v291 = vsub.f32 %v259, %v275
        %v292 = vadd.f32 %v276, %v278
        %v293 = vadd.f32 %v292, %v280
        %v294 = vadd.f32 %v293, %v282
        %v295 = vadd.f32 %v294, %v284
        %v296 = vadd.f32 %v295, %v286
        %v297 = vadd.f32 %v296, %v288
        %v298 = vadd.f32 %v297, %v290
        %v299 = vrot.slane %v298, 4
        %v300 = vadd.f32 %v298, %v299
        %v301 = vrot.slane %v300, 2
        %v302 = vadd.f32 %v300, %v301
        %v303 = vrot.slane %v302, 1
        %v304 = vadd.f32 %v302, %v303
        %v305 = vadd.f32 %v277, %v279
        %v306 = vadd.f32 %v305, %v281
        %v307 = vadd.f32 %v306, %v283
        %v308 = vadd.f32 %v307, %v285
        %v309 = vadd.f32 %v308, %v287
        %v310 = vadd.f32 %v309, %v289
        %v311 = vadd.f32 %v310, %v291
        %v312 = vrot.slane %v311, 4
        %v313 = vadd.f32 %v311, %v312
        %v314 = vrot.slane %v313, 2
        %v315 = vadd.f32 %v313, %v314
        %v316 = vrot.slane %v315, 1
        %v317 = vadd.f32 %v315, %v316
        %v320 = vcombine.low %v304, %v317
        %v322 = vunpack.c.l.s4 1966171168
        %v323 = vunpack.c.0.s8 %v322
        %v324 = vlaneseq
        %v325 = vshrl.u32 %v324, 7
        %v326 = vsub.s32 %v323, %v325
        %v327 = vrot.slane %v320, %v326
        %v329 = vunpack.c.l.s4 1966171168
        %v330 = vunpack.c.0.s8 %v329
        %v331 = vlaneseq
        %v332 = vshrl.u32 %v331, 7
        %v333 = vsub.s32 %v330, %v332
        %v334 = vrot.slane %v327, %v333
        %v336 = vlaneseq
        %vm337 = vcmp.ge.s32.totalorder %v336, 0
        %vm338 = vcmp.lt.s32.totalorder %v336, 256
        %vm339 = vmand %vm337, %vm338
        %340 = vst.msk [vmem:[%s234] sm:$0x3] %vm339, %v334
        %v341 = vand.u32 2147483647, %v276
        %v342 = vand.u32 2147483647, %v277
        %v343 = vand.u32 2147483647, %v278
        %v344 = vand.u32 2147483647, %v279
        %v345 = vand.u32 2147483647, %v280
        %v346 = vand.u32 2147483647, %v281
        %v347 = vand.u32 2147483647, %v282
        %v348 = vand.u32 2147483647, %v283
        %v349 = vand.u32 2147483647, %v284
        %v350 = vand.u32 2147483647, %v285
        %v351 = vand.u32 2147483647, %v286
        %v352 = vand.u32 2147483647, %v287
        %v353 = vand.u32 2147483647, %v288
        %v354 = vand.u32 2147483647, %v289
        %v355 = vand.u32 2147483647, %v290
        %v356 = vand.u32 2147483647, %v291
        %v357 = vadd.f32 %v341, %v343
        %v358 = vadd.f32 %v357, %v345
        %v359 = vadd.f32 %v358, %v347
        %v360 = vadd.f32 %v359, %v349
        %v361 = vadd.f32 %v360, %v351
        %v362 = vadd.f32 %v361, %v353
        %v363 = vadd.f32 %v362, %v355
        %v364 = vrot.slane %v363, 4
        %v365 = vadd.f32 %v363, %v364
        %v366 = vrot.slane %v365, 2
        %v367 = vadd.f32 %v365, %v366
        %v368 = vrot.slane %v367, 1
        %v369 = vadd.f32 %v367, %v368
        %v370 = vadd.f32 %v342, %v344
        %v371 = vadd.f32 %v370, %v346
        %v372 = vadd.f32 %v371, %v348
        %v373 = vadd.f32 %v372, %v350
        %v374 = vadd.f32 %v373, %v352
        %v375 = vadd.f32 %v374, %v354
        %v376 = vadd.f32 %v375, %v356
        %v377 = vrot.slane %v376, 4
        %v378 = vadd.f32 %v376, %v377
        %v379 = vrot.slane %v378, 2
        %v380 = vadd.f32 %v378, %v379
        %v381 = vrot.slane %v380, 1
        %v382 = vadd.f32 %v380, %v381
        %v385 = vcombine.low %v369, %v382
        %v387 = vunpack.c.l.s4 1966171168
        %v388 = vunpack.c.0.s8 %v387
        %v389 = vlaneseq
        %v390 = vshrl.u32 %v389, 7
        %v391 = vsub.s32 %v388, %v390
        %v392 = vrot.slane %v385, %v391
        %v394 = vunpack.c.l.s4 1966171168
        %v395 = vunpack.c.0.s8 %v394
        %v396 = vlaneseq
        %v397 = vshrl.u32 %v396, 7
        %v398 = vsub.s32 %v395, %v397
        %v399 = vrot.slane %v392, %v398
        %401 = vst.msk [vmem:[%s241] sm:$0x3] %vm339, %v399
        %s402 = sand.u32 %s87, 1
        %s403 = scalar_lea.sflag [#allocation4], %s402
        %s404 = sand.u32 %s87, 1
        %s405 = smul.addr %s404, 2
        %s406 = scalar_lea.vmem [#allocation7], %s405
        %s407 = sand.u32 %s113, 1
        %s408 = scalar_lea.sflag [#allocation9], %s407
        %s409 = sand.u32 %s113, 1
        %s410 = smul.addr %s409, 2
        %s411 = scalar_lea.vmem [#allocation8], %s410
        // Predicated region
        $region37: #{tpu_custom_call.1} parent=27 // pred_check
          %p412 = pneg %p97
        $region38: #{tpu_custom_call.1} parent=27 // pred_check_branch
          %414 = sbr.rel (%p412) target = $region40
        $region39: #{tpu_custom_call.1} parent=27 // pred_region
          %s416 = ssub.s32 32, 32
          %417 = vsyncadd %s403, %s416
          %s418 = smul.addr %s27, 2
          %s419 = smul.addr %s418, 16
          %s420 = scalar_lea.hbm %s2, %s419
          %s422 = sshll.u32 %s406, 4
          %s423 = int_to_ptr.vmem [resolvable:$true] %s422
          %425 = dma.vmem_to_hbm [thread:$0]  %s423, 32, %s420, %s403
        $region40: #{tpu_custom_call.1} parent=27 // pred_fallthru
          _
        // Predicated region
        $region41: #{tpu_custom_call.1} parent=27 // pred_check
          %p426 = pneg %p123
        $region42: #{tpu_custom_call.1} parent=27 // pred_check_branch
          %428 = sbr.rel (%p426) target = $region44
        $region43: #{tpu_custom_call.1} parent=27 // pred_region
          %s430 = ssub.s32 32, 32
          %431 = vsyncadd %s408, %s430
          %s432 = smul.addr %s27, 2
          %s433 = smul.addr %s432, 16
          %s434 = scalar_lea.hbm %s3, %s433
          %s436 = sshll.u32 %s411, 4
          %s437 = int_to_ptr.vmem [resolvable:$true] %s436
          %439 = dma.vmem_to_hbm [thread:$0]  %s437, 32, %s434, %s408
        $region44: #{tpu_custom_call.1} parent=27 // pred_fallthru
          _
      $region28: #{tpu_custom_call.1} parent=5 // pred_fallthru
        _
      %p440 = scmp.le.s32.totalorder 2, %s22
      // Predicated region
      $region45: #{tpu_custom_call.1} parent=5 // pred_check
        %p441 = pneg %p440
      $region46: #{tpu_custom_call.1} parent=5 // pred_check_branch
        %443 = sbr.rel (%p441) target = $region48
      $region47: #{tpu_custom_call.1} parent=5 // pred_region
        %s444 = ssub.s32 %s22, 2
        // Predicated region
        $region49: #{tpu_custom_call.1} parent=47 // pred_check
          %p445 = pneg %p103
        $region50: #{tpu_custom_call.1} parent=47 // pred_check_branch
          %447 = sbr.rel (%p445) target = $region52
        $region51: #{tpu_custom_call.1} parent=47 // pred_region
          %s448 = sand.u32 %s88, 1
          %s449 = scalar_lea.sflag [#allocation4], %s448
          %s450 = sand.u32 %s88, 1
          %s451 = smul.addr %s450, 2
          %s452 = scalar_lea.vmem [#allocation7], %s451
          %453 = dma.done %s449, 32
        $region52: #{tpu_custom_call.1} parent=47 // pred_fallthru
          _
        // Predicated region
        $region53: #{tpu_custom_call.1} parent=47 // pred_check
          %p454 = pneg %p129
        $region54: #{tpu_custom_call.1} parent=47 // pred_check_branch
          %456 = sbr.rel (%p454) target = $region56
        $region55: #{tpu_custom_call.1} parent=47 // pred_region
          %s457 = sand.u32 %s114, 1
          %s458 = scalar_lea.sflag [#allocation9], %s457
          %s459 = sand.u32 %s114, 1
          %s460 = smul.addr %s459, 2
          %s461 = scalar_lea.vmem [#allocation8], %s460
          %462 = dma.done %s458, 32
        $region56: #{tpu_custom_call.1} parent=47 // pred_fallthru
          _
      $region48: #{tpu_custom_call.1} parent=5 // pred_fallthru
        _
    $region6: #{tpu_custom_call.1} parent=1 // loop_footer
      %s26 = sadd.s32 1, %s22
    $region7: #{tpu_custom_call.1} parent=1 // loop_footer_branch
      %21 = sbr.rel target = $region3
    $region8: #{tpu_custom_call.1} parent=1 // loop_exit
      _
    %463 = vsyncpa [#allocation3], 1
    %s464 = scalar_lea.sflag [#allocation3], 1
    %465 = vsyncpa %s464, 1
    %466 = vsyncpa [#allocation6], 1
    %s467 = scalar_lea.sflag [#allocation6], 1
    %468 = vsyncpa %s467, 1
    %469 = vsyncpa [#allocation4], 1
    %s470 = scalar_lea.sflag [#allocation4], 1
    %471 = vsyncpa %s470, 1
    %472 = vsyncpa [#allocation9], 1
    %s473 = scalar_lea.sflag [#allocation9], 1
    %474 = vsyncpa %s473, 1

</llo_original>
